<compile_context>
chip_gen: v7x
topology: tpu7x:2x2x1
jax: 0.10.0
libtpu: 0.0.40
codegen_flags: <defaults>
</compile_context>

<pallas_src>
import functools

import jax
import jax.numpy as jnp
from jax.experimental import pallas as pl
from jax.experimental.pallas import tpu as pltpu


def _vmem_block_budget():
    """Byte budget for the double-buffered x in+out blocks, per generation."""
    try:
        info = pltpu.get_tpu_info()
        vmem = getattr(info, "vmem_capacity_bytes", None)
        if vmem is not None:
            # v7x: 64 MiB physical VMEM -> keep blocks small; v5e/v6e: 128 MiB.
            if vmem <= 64 * 1024 * 1024:
                return 16 * 1024 * 1024
            return 32 * 1024 * 1024
    except Exception:
        pass
    return 16 * 1024 * 1024  # unknown generation: be conservative


def _pick_batch_block(B, C, HW, itemsize, budget):
    """Largest divisor of B whose double-buffered in+out x tiles fit `budget`
    while keeping >= min(B, 4) grid steps (>= 2 per TensorCore on v7x)."""
    per_image = C * HW * itemsize
    min_steps = min(B, 4)
    best = 1
    for bb in range(1, B + 1):
        if B % bb:
            continue
        if 4 * bb * per_image > budget:  # 2 bufs in + 2 bufs out
            break
        if B // bb < min_steps:
            continue
        best = bb
    return best


def _pick_channel_block(C, HW, itemsize, budget):
    """Largest multiple-of-8 divisor of C whose double-buffered in+out x tiles
    fit `budget` (falls back to the smallest such divisor, or full C)."""
    divisors = [d for d in range(8, C + 1, 8) if C % d == 0]
    if not divisors:
        return C  # block == full array dim is always legal
    best = divisors[0]
    for d in divisors:
        if 4 * d * HW * itemsize <= budget:
            best = d
    return best


# --------------------------- kernels ---------------------------------------


def _se_kernel(x_ref, w1_ref, w2_ref, o_ref, *, inv_hw):
    # x_ref/o_ref: (Bb, C, HW)   w1_ref: (C, C_r)   w2_ref: (C_r, C)
    x = x_ref[...]  # input dtype

    # Squeeze: global average pool over the spatial (lane) axis, f32 accum.
    # TODO(synk): on v5e, if a bundle dump shows VPU/XLU (not DMA) as the
    # limiter, move this reduce to the otherwise-idle MXU (einsum vs. ones).
    pooled = jnp.sum(x, axis=-1, dtype=jnp.float32) * inv_hw  # (Bb, C) f32

    # Excitation (tiny): fc1 -> ReLU -> fc2 -> sigmoid, in f32 on MXU/EUP.
    h = jnp.dot(pooled, w1_ref[...].astype(jnp.float32),
                preferred_element_type=jnp.float32)           # (Bb, C_r)
    h = jnp.maximum(h, 0.0)
    y = jnp.dot(h, w2_ref[...].astype(jnp.float32),
                preferred_element_type=jnp.float32)           # (Bb, C)
    y = jax.nn.sigmoid(y)

    # Scale: keep the bulk multiply in the input dtype (bf16 stays bf16).
    # TODO(synk): for tiny maps (HW <= 64), folding a channel group into the
    # lane axis would make vld/vst lane-dense — only if profiled as the limit.
    o_ref[...] = x * y.astype(x.dtype)[:, :, None]


def _pool_kernel(x_ref, p_ref, *, inv_hw):
    # x_ref: (1, Cb, HW)   p_ref: (1, Cb, 1) f32
    p_ref[...] = (jnp.sum(x_ref[...], axis=-1, keepdims=True,
                          dtype=jnp.float32) * inv_hw)


def _scale_kernel(x_ref, g_ref, o_ref):
    # x_ref/o_ref: (1, Cb, HW)   g_ref: (1, Cb, 1) in x.dtype
    o_ref[...] = x_ref[...] * g_ref[...]


# --------------------------- wrapper ----------------------------------------


def _se_layer_impl(x, fc1_w, fc2_w, *, force_two_phase=False):
    """x: (B, C, H, W).  fc1_w: (C//r, C), fc2_w: (C, C//r) in PyTorch
    (out, in) Linear layout, no bias.  Returns (B, C, H, W) in x.dtype."""
    B, C, H, W = x.shape
    HW = H * W
    C_r = fc1_w.shape[0]
    inv_hw = float(1.0 / HW)

    # PyTorch Linear weights are (out, in); transpose, keep their native dtype
    # (bf16 weights stay bf16 in HBM) and upcast only inside the excitation.
    w1 = fc1_w.T  # (C, C_r)
    w2 = fc2_w.T  # (C_r, C)

    xr = x.reshape(B, C, HW)
    itemsize = jnp.dtype(x.dtype).itemsize
    budget = _vmem_block_budget()
    per_image = C * HW * itemsize
    w_bytes = (w1.size * jnp.dtype(w1.dtype).itemsize
               + w2.size * jnp.dtype(w2.dtype).itemsize) * 2
    margin = 4 * 1024 * 1024

    two_phase = force_two_phase or (4 * per_image > budget)

    if not two_phase:
        # ---- Single pass: one fused pool+excite+scale kernel per batch block.
        Bb = _pick_batch_block(B, C, HW, itemsize, budget)
        grid = (B // Bb,)
        block_bytes = 4 * Bb * per_image
        vmem_limit = int(max(16 * 1024 * 1024, block_bytes + w_bytes + margin))

        out = pl.pallas_call(
            functools.partial(_se_kernel, inv_hw=inv_hw),
            out_shape=jax.ShapeDtypeStruct((B, C, HW), x.dtype),
            grid_spec=pltpu.PrefetchScalarGridSpec(
                num_scalar_prefetch=0,
                grid=grid,
                in_specs=[
                    # Full (C, HW) trailing block == array dims: always legal,
                    # no padding / slicing passes needed.
                    pl.BlockSpec((Bb, C, HW), lambda b: (b, 0, 0)),
                    pl.BlockSpec((C, C_r), lambda b: (0, 0)),
                    pl.BlockSpec((C_r, C), lambda b: (0, 0)),
                ],
                out_specs=pl.BlockSpec((Bb, C, HW), lambda b: (b, 0, 0)),
            ),
            compiler_params=pltpu.CompilerParams(
                dimension_semantics=("parallel",),
                vmem_limit_bytes=vmem_limit,
            ),
        )(xr, w1, w2)
        return out.reshape(B, C, H, W)

    # ---- Two-phase pool-then-scale fallback (channel-tiled blocks) ----------
    Cb = _pick_channel_block(C, HW, itemsize, budget)
    grid = (B, C // Cb)
    tile_bytes = Cb * HW * itemsize

    pooled = pl.pallas_call(
        functools.partial(_pool_kernel, inv_hw=inv_hw),
        out_shape=jax.ShapeDtypeStruct((B, C, 1), jnp.float32),
        grid_spec=pltpu.PrefetchScalarGridSpec(
            num_scalar_prefetch=0,
            grid=grid,
            in_specs=[pl.BlockSpec((1, Cb, HW), lambda b, c: (b, c, 0))],
            out_specs=pl.BlockSpec((1, Cb, 1), lambda b, c: (b, c, 0)),
        ),
        compiler_params=pltpu.CompilerParams(
            dimension_semantics=("parallel", "parallel"),
            vmem_limit_bytes=int(max(16 * 1024 * 1024,
                                     2 * tile_bytes + margin)),
        ),
    )(xr)

    # Tiny excitation as a plain XLA op between the two streaming kernels.
    p = pooled[:, :, 0]                                          # (B, C) f32
    h = jnp.maximum(jnp.dot(p, w1.astype(jnp.float32),
                            preferred_element_type=jnp.float32), 0.0)
    y = jax.nn.sigmoid(jnp.dot(h, w2.astype(jnp.float32),
                               preferred_element_type=jnp.float32))
    gate = y.astype(x.dtype)[:, :, None]                         # (B, C, 1)

    out = pl.pallas_call(
        _scale_kernel,
        out_shape=jax.ShapeDtypeStruct((B, C, HW), x.dtype),
        grid_spec=pltpu.PrefetchScalarGridSpec(
            num_scalar_prefetch=0,
            grid=grid,
            in_specs=[
                pl.BlockSpec((1, Cb, HW), lambda b, c: (b, c, 0)),
                pl.BlockSpec((1, Cb, 1), lambda b, c: (b, c, 0)),
            ],
            out_specs=pl.BlockSpec((1, Cb, HW), lambda b, c: (b, c, 0)),
        ),
        compiler_params=pltpu.CompilerParams(
            dimension_semantics=("parallel", "parallel"),
            vmem_limit_bytes=int(max(16 * 1024 * 1024,
                                     4 * tile_bytes + margin)),
        ),
    )(xr, gate)
    return out.reshape(B, C, H, W)


se_layer = jax.jit(_se_layer_impl, static_argnames=("force_two_phase",))


def se_layer_ref(x, fc1_w, fc2_w):
    """Pure-JAX reference (mirrors the PyTorch forward)."""
    pooled = jnp.mean(x.astype(jnp.float32), axis=(2, 3))            # (B, C)
    h = jnp.maximum(pooled @ fc1_w.astype(jnp.float32).T, 0.0)       # (B, C_r)
    y = jax.nn.sigmoid(h @ fc2_w.astype(jnp.float32).T)              # (B, C)
    return (x.astype(jnp.float32) * y[:, :, None, None]).astype(x.dtype)


if __name__ == "__main__":
    reduction = 16
    configs = [
        # (B, C, H, W, dtype, force_two_phase)
        (2, 32, 16, 16, jnp.float32, False),   # HW=256: lane-dense blocks
        (2, 32, 14, 14, jnp.float32, False),   # HW=196: no pad, masked tail vst
        (4, 64, 14, 14, jnp.bfloat16, False),  # bf16 path, 4 parallel steps
        (2, 32, 16, 16, jnp.float32, True),    # exercise pool-then-scale path
    ]

    key = jax.random.PRNGKey(0)
    for (B, C, H, W, dtype, two_phase) in configs:
        C_r = max(1, C // reduction)
        key, kx, k1, k2 = jax.random.split(key, 4)

        x = jax.random.normal(kx, (B, C, H, W), dtype=jnp.float32).astype(dtype)
        # PyTorch Linear weights are (out, in); pass them in that layout.
        fc1_w = jax.random.normal(k1, (C_r, C), dtype=jnp.float32) * (1.0 / C) ** 0.5
        fc2_w = jax.random.normal(k2, (C, C_r), dtype=jnp.float32) * (1.0 / C_r) ** 0.5

        out = jax.block_until_ready(
            se_layer(x, fc1_w, fc2_w, force_two_phase=two_phase))
        ref = se_layer_ref(x, fc1_w, fc2_w)

        assert out.shape == x.shape and out.dtype == x.dtype
        tol = 1e-5 if dtype == jnp.float32 else 3e-2
        assert jnp.allclose(out.astype(jnp.float32), ref.astype(jnp.float32),
                            atol=tol, rtol=tol), (B, C, H, W, dtype, two_phase)

    print("KERNEL_OK")
</pallas_src>

<mosaic_0001>
module attributes {stable_mosaic.version = 11 : i64} {
  func.func @_se_kernel(%arg0: i32, %arg1: memref<1x32x256xf32, #tpu.memory_space<vmem>>, %arg2: memref<32x2xf32, #tpu.memory_space<vmem>>, %arg3: memref<2x32xf32, #tpu.memory_space<vmem>>, %arg4: memref<1x32x256xf32, #tpu.memory_space<vmem>>) attributes {dimension_semantics = [#tpu.dimension_semantics<parallel>], iteration_bounds = array<i64: 2>, scalar_prefetch = 0 : i64, scratch_operands = 0 : i64, tpu.core_type = #tpu.core_type<tc>, window_params = [{transform_indices = @transform_0, window_bounds = array<i64: 1, 32, 256>}, {pipeline_mode = #tpu.pipeline_mode<synchronous>, transform_indices = @transform_1, window_bounds = array<i64: 32, 2>}, {pipeline_mode = #tpu.pipeline_mode<synchronous>, transform_indices = @transform_2, window_bounds = array<i64: 2, 32>}, {transform_indices = @transform_3, window_bounds = array<i64: 1, 32, 256>}]} {
    %c0 = arith.constant 0 : index
    %c0_0 = arith.constant 0 : index
    %c0_1 = arith.constant 0 : index
    %0 = vector.load %arg1[%c0, %c0_0, %c0_1] : memref<1x32x256xf32, #tpu.memory_space<vmem>>, vector<1x32x256xf32>
    %cst = arith.constant dense<0.000000e+00> : vector<1x32xf32>
    %1 = vector.multi_reduction <add>, %0, %cst [2] : vector<1x32x256xf32> to vector<1x32xf32>
    %cst_2 = arith.constant 3.906250e-03 : f32
    %2 = vector.broadcast %cst_2 : f32 to vector<1x32xf32>
    %3 = arith.mulf %1, %2 : vector<1x32xf32>
    %c0_3 = arith.constant 0 : index
    %c0_4 = arith.constant 0 : index
    %4 = vector.load %arg2[%c0_3, %c0_4] : memref<32x2xf32, #tpu.memory_space<vmem>>, vector<32x2xf32>
    %cst_5 = arith.constant dense<0.000000e+00> : vector<1x2xf32>
    %5 = tpu.matmul %3, %4, %cst_5 {dimension_numbers = #tpu.dot_dimension_numbers<[1], [0], [0], [1], [0, 0, 1, 1], [], []>} : vector<1x32xf32>, vector<32x2xf32>, vector<1x2xf32> -> vector<1x2xf32>
    %cst_6 = arith.constant 0.000000e+00 : f32
    %6 = vector.broadcast %cst_6 : f32 to vector<1x2xf32>
    %7 = arith.maximumf %5, %6 : vector<1x2xf32>
    %c0_7 = arith.constant 0 : index
    %c0_8 = arith.constant 0 : index
    %8 = vector.load %arg3[%c0_7, %c0_8] : memref<2x32xf32, #tpu.memory_space<vmem>>, vector<2x32xf32>
    %cst_9 = arith.constant dense<0.000000e+00> : vector<1x32xf32>
    %9 = tpu.matmul %7, %8, %cst_9 {dimension_numbers = #tpu.dot_dimension_numbers<[1], [0], [0], [1], [0, 0, 1, 1], [], []>} : vector<1x2xf32>, vector<2x32xf32>, vector<1x32xf32> -> vector<1x32xf32>
    %10 = arith.negf %9 : vector<1x32xf32>
    %11 = math.exp %10 : vector<1x32xf32>
    %cst_10 = arith.constant 1.000000e+00 : f32
    %12 = vector.broadcast %cst_10 : f32 to vector<1x32xf32>
    %13 = arith.addf %12, %11 : vector<1x32xf32>
    %14 = arith.divf %12, %13 : vector<1x32xf32>
    %15 = vector.shape_cast %14 : vector<1x32xf32> to vector<1x32x1xf32>
    %16 = vector.broadcast %15 : vector<1x32x1xf32> to vector<1x32x256xf32>
    %17 = arith.mulf %0, %16 : vector<1x32x256xf32>
    %c0_11 = arith.constant 0 : index
    %c0_12 = arith.constant 0 : index
    %c0_13 = arith.constant 0 : index
    %18 = vector.load %arg4[%c0_11, %c0_12, %c0_13] : memref<1x32x256xf32, #tpu.memory_space<vmem>>, vector<1x32x256xf32>
    tpu.vector_store %arg4[%c0_11, %c0_12, %c0_13], %17 {strides = array<i32>} : memref<1x32x256xf32, #tpu.memory_space<vmem>>, vector<1x32x256xf32>,
    return
  }
  func.func @transform_0(%arg0: i32) -> (i32, i32, i32) {
    %c0_i32 = arith.constant 0 : i32
    %c0_i32_0 = arith.constant 0 : i32
    %c0_i32_1 = arith.constant 0 : i32
    return %arg0, %c0_i32, %c0_i32_0 : i32, i32, i32
  }
  func.func @transform_1(%arg0: i32) -> (i32, i32) {
    %c0_i32 = arith.constant 0 : i32
    %c0_i32_0 = arith.constant 0 : i32
    %c0_i32_1 = arith.constant 0 : i32
    return %c0_i32, %c0_i32_0 : i32, i32
  }
  func.func @transform_2(%arg0: i32) -> (i32, i32) {
    %c0_i32 = arith.constant 0 : i32
    %c0_i32_0 = arith.constant 0 : i32
    %c0_i32_1 = arith.constant 0 : i32
    return %c0_i32, %c0_i32_0 : i32, i32
  }
  func.func @transform_3(%arg0: i32) -> (i32, i32, i32) {
    %c0_i32 = arith.constant 0 : i32
    %c0_i32_0 = arith.constant 0 : i32
    %c0_i32_1 = arith.constant 0 : i32
    return %arg0, %c0_i32, %c0_i32_0 : i32, i32, i32
  }
}

</mosaic_0001>

<llo_original>
// kernel: _se_layer_impl.1
$region0: #{_se_layer_impl.1}
  #allocation0 [shape = 'u32[]', space=smem, size = 0x4, offset = 0x4, fixed_abs, tag = 'smem constant byte address 0x4 - core index']
  #allocation1 [shape = 'u32[144,128]{1,0:T(1,128)}', space=vmem, size = 0x12000, scoped, tag = 'internal scratch']
  %s0 = inlined_call_operand.vmem [shape: f32[2,32,256], index: 0, kind: input, shape index: {}]
  %s1 = inlined_call_operand.vmem [shape: f32[32,2], index: 1, kind: input, shape index: {}]
  %s2 = inlined_call_operand.vmem [shape: f32[2,32], index: 2, kind: input, shape index: {}]
  %s3 = inlined_call_operand.vmem [shape: f32[2,32,256], index: 3, kind: output, shape index: {}]
  %s4 = sld [smem:[#allocation0]]
  $region45: #{_se_layer_impl.1} parent=0
    _
  %s6 = ssub.s32 1, %s4
  %s7 = scalar_select 0, %s6, %s4
  loop: start=0, step=1, limit=4
  $region2: #{_se_layer_impl.1} parent=0 // loop_pre_header
    _
  $region3: #{_se_layer_impl.1} parent=0 // loop_header
    %s9 = sphi 0, %s13
    %p10 = scmp.ge.s32.totalorder %s9, 4
    %s19 = sphi 0, %s21
    %s22 = sphi 0, %s19
    %s23 = sphi 0, %s22
    %s39 = sphi 0, %s23
    %s43 = sphi 0, %s43
    %s45 = sphi 0, %s43
    %s46 = sphi 0, %s45
    %s60 = sphi 0, %s46
    %s64 = sphi 0, %s64
    %s66 = sphi 0, %s64
    %s67 = sphi 0, %s66
    %s81 = sphi 0, %s67
    %s87 = sphi 0, %s89
    %s90 = sphi 0, %s87
    %s91 = sphi 0, %s90
    %s107 = sphi 0, %s91
  $region4: #{_se_layer_impl.1} parent=0 // loop_header_branch
    %12 = sbr.rel (%p10) target = $region8
  $region5: #{_se_layer_impl.1} parent=0 // loop_body
    %s14 = ssub.s32 %s9, 1
    %s15 = ssub.s32 %s9, 2
    %s16 = sadd.s32 %s9, 1
    %s17 = ssub.s32 %s9, %s16
    %p18 = scmp.eq.s32.totalorder %s17, 0
    %s20 = sadd.s32 %s19, 1
    %s21 = scalar_select %p18, %s19, %s20
    %p24 = pneg %p18
    %p25 = scmp.eq.s32.totalorder %s9, 1
    %p26 = por %p24, %p25
    %p27 = scmp.ne.s32.totalorder %s19, %s22
    %p28 = scmp.eq.s32.totalorder %s9, 0
    %p29 = por %p27, %p28
    %p30 = scmp.ne.s32.totalorder %s19, %s22
    %p31 = scmp.eq.s32.totalorder %s14, 1
    %p32 = por %p30, %p31
    %p33 = scmp.ne.s32.totalorder %s22, %s23
    %p34 = scmp.eq.s32.totalorder %s14, 0
    %p35 = por %p33, %p34
    %p36 = scmp.ne.s32.totalorder %s22, %s23
    %p37 = scmp.eq.s32.totalorder %s15, 1
    %p38 = por %p36, %p37
    %p40 = scmp.ne.s32.totalorder %s23, %s39
    %p41 = scmp.eq.s32.totalorder %s15, 0
    %p42 = por %p40, %p41
    %s44 = sadd.s32 %s43, 1
    %p47 = scmp.eq.s32.totalorder %s9, 1
    %p48 = scmp.ne.s32.totalorder %s43, %s45
    %p49 = scmp.eq.s32.totalorder %s9, 0
    %p50 = por %p48, %p49
    %p51 = scmp.ne.s32.totalorder %s43, %s45
    %p52 = scmp.eq.s32.totalorder %s14, 1
    %p53 = por %p51, %p52
    %p54 = scmp.ne.s32.totalorder %s45, %s46
    %p55 = scmp.eq.s32.totalorder %s14, 0
    %p56 = por %p54, %p55
    %p57 = scmp.ne.s32.totalorder %s45, %s46
    %p58 = scmp.eq.s32.totalorder %s15, 1
    %p59 = por %p57, %p58
    %p61 = scmp.ne.s32.totalorder %s46, %s60
    %p62 = scmp.eq.s32.totalorder %s15, 0
    %p63 = por %p61, %p62
    %s65 = sadd.s32 %s64, 1
    %p68 = scmp.eq.s32.totalorder %s9, 1
    %p69 = scmp.ne.s32.totalorder %s64, %s66
    %p70 = scmp.eq.s32.totalorder %s9, 0
    %p71 = por %p69, %p70
    %p72 = scmp.ne.s32.totalorder %s64, %s66
    %p73 = scmp.eq.s32.totalorder %s14, 1
    %p74 = por %p72, %p73
    %p75 = scmp.ne.s32.totalorder %s66, %s67
    %p76 = scmp.eq.s32.totalorder %s14, 0
    %p77 = por %p75, %p76
    %p78 = scmp.ne.s32.totalorder %s66, %s67
    %p79 = scmp.eq.s32.totalorder %s15, 1
    %p80 = por %p78, %p79
    %p82 = scmp.ne.s32.totalorder %s67, %s81
    %p83 = scmp.eq.s32.totalorder %s15, 0
    %p84 = por %p82, %p83
    %s85 = ssub.s32 %s9, %s16
    %p86 = scmp.eq.s32.totalorder %s85, 0
    %s88 = sadd.s32 %s87, 1
    %s89 = scalar_select %p86, %s87, %s88
    %p92 = pneg %p86
    %p93 = scmp.eq.s32.totalorder %s9, 1
    %p94 = por %p92, %p93
    %p95 = scmp.ne.s32.totalorder %s87, %s90
    %p96 = scmp.eq.s32.totalorder %s9, 0
    %p97 = por %p95, %p96
    %p98 = scmp.ne.s32.totalorder %s87, %s90
    %p99 = scmp.eq.s32.totalorder %s14, 1
    %p100 = por %p98, %p99
    %p101 = scmp.ne.s32.totalorder %s90, %s91
    %p102 = scmp.eq.s32.totalorder %s14, 0
    %p103 = por %p101, %p102
    %p104 = scmp.ne.s32.totalorder %s90, %s91
    %p105 = scmp.eq.s32.totalorder %s15, 1
    %p106 = por %p104, %p105
    %p108 = scmp.ne.s32.totalorder %s91, %s107
    %p109 = scmp.eq.s32.totalorder %s15, 0
    %p110 = por %p108, %p109
    %p111 = scmp.le.s32.totalorder 1, %s9
    %p112 = scmp.lt.s32.totalorder %s9, 3
    %p113 = pnand %p111, %p112
    %p114 = pneg %p113
    // Predicated region
    $region9: #{_se_layer_impl.1} parent=5 // pred_check
      _
    $region10: #{_se_layer_impl.1} parent=5 // pred_check_branch
      %116 = sbr.rel (%p113) target = $region12
    $region11: #{_se_layer_impl.1} parent=5 // pred_region
      %s117 = ssub.s32 %s9, 1
      // Predicated region
      $region13: #{_se_layer_impl.1} parent=11 // pred_check
        %p118 = pneg %p56
      $region14: #{_se_layer_impl.1} parent=11 // pred_check_branch
        %120 = sbr.rel (%p118) target = $region16
      $region15: #{_se_layer_impl.1} parent=11 // pred_region
        _
      $region16: #{_se_layer_impl.1} parent=11 // pred_fallthru
        _
      // Predicated region
      $region17: #{_se_layer_impl.1} parent=11 // pred_check
        %p121 = pneg %p77
      $region18: #{_se_layer_impl.1} parent=11 // pred_check_branch
        %123 = sbr.rel (%p121) target = $region20
      $region19: #{_se_layer_impl.1} parent=11 // pred_region
        _
      $region20: #{_se_layer_impl.1} parent=11 // pred_fallthru
        _
    $region12: #{_se_layer_impl.1} parent=5 // pred_fallthru
      _
    %p124 = scmp.lt.s32.totalorder %s9, 2
    // Predicated region
    $region21: #{_se_layer_impl.1} parent=5 // pred_check
      %p125 = pneg %p124
    $region22: #{_se_layer_impl.1} parent=5 // pred_check_branch
      %127 = sbr.rel (%p125) target = $region24
    $region23: #{_se_layer_impl.1} parent=5 // pred_region
      // Predicated region
      $region25: #{_se_layer_impl.1} parent=23 // pred_check
        %p128 = pneg %p29
      $region26: #{_se_layer_impl.1} parent=23 // pred_check_branch
        %130 = sbr.rel (%p128) target = $region28
      $region27: #{_se_layer_impl.1} parent=23 // pred_region
        %p131 = scmp.lt.s32.totalorder %s9, 1
        %s132 = scalar_select %p131, %s9, 1
        %s133 = smul.addr %s132, 8
        %s134 = smul.addr %s133, 8
        %s135 = scalar_lea.vmem %s0, %s134
      $region28: #{_se_layer_impl.1} parent=23 // pred_fallthru
        _
    $region24: #{_se_layer_impl.1} parent=5 // pred_fallthru
      _
    %p136 = scmp.le.s32.totalorder 1, %s9
    %p137 = scmp.lt.s32.totalorder %s9, 3
    %p138 = pnand %p136, %p137
    %p139 = pneg %p138
    // Predicated region
    $region29: #{_se_layer_impl.1} parent=5 // pred_check
      _
    $region30: #{_se_layer_impl.1} parent=5 // pred_check_branch
      %141 = sbr.rel (%p138) target = $region32
    $region31: #{_se_layer_impl.1} parent=5 // pred_region
      %s142 = ssub.s32 %s9, 1
      %p143 = scmp.lt.s32.totalorder %s14, 1
      %s144 = scalar_select %p143, %s14, 1
      %s145 = smul.addr %s144, 8
      %s146 = smul.addr %s145, 8
      %s147 = scalar_lea.vmem %s0, %s146
      %p148 = pneg %p35
      %p149 = pneg %p32
      %p150 = pneg %p56
      %p151 = pneg %p53
      %p152 = pneg %p77
      %p153 = pneg %p74
      %p154 = pneg %p103
      %p155 = pneg %p100
      %p156 = scmp.lt.s32.totalorder %s14, 1
      %s157 = scalar_select %p156, %s14, 1
      %s158 = smul.addr %s157, 8
      %s159 = smul.addr %s158, 8
      %s160 = scalar_lea.vmem %s3, %s159
      %p161 = scmp.lt.s32.totalorder %s14, 1
      %s162 = scalar_select %p161, %s14, 1
      %s163 = smul.addr %s162, 8
      %s164 = smul.addr %s163, 8
      %s165 = scalar_lea.vmem %s0, %s164
      %p166 = scmp.lt.s32.totalorder %s14, 1
      %s167 = scalar_select %p166, %s14, 1
      %s168 = smul.addr %s167, 8
      %s169 = smul.addr %s168, 8
      %s170 = scalar_lea.vmem %s3, %s169
      %v171 = vld [vmem:[%s165] sm:$0xff]
      %v172 = vld [vmem:[%s165 + $0x8] sm:$0xff]
      %v173 = vld [vmem:[%s165 + $0x10] sm:$0xff]
      %v174 = vld [vmem:[%s165 + $0x18] sm:$0xff]
      %v175 = vld [vmem:[%s165 + $0x20] sm:$0xff]
      %v176 = vld [vmem:[%s165 + $0x28] sm:$0xff]
      %v177 = vld [vmem:[%s165 + $0x30] sm:$0xff]
      %v178 = vld [vmem:[%s165 + $0x38] sm:$0xff]
      %v179 = vadd.f32 %v171, %v172
      %180 = vadd.xlane.f32.xlu0 %v179
      %v181 = vpop.xlane.xlu0 %180
      %v182 = vadd.f32 %v173, %v174
      %183 = vadd.xlane.f32.xlu0 %v182
      %v184 = vpop.xlane.xlu0 %183
      %v185 = vadd.f32 %v175, %v176
      %186 = vadd.xlane.f32.xlu0 %v185
      %v187 = vpop.xlane.xlu0 %186
      %v188 = vadd.f32 %v177, %v178
      %189 = vadd.xlane.f32.xlu0 %v188
      %v190 = vpop.xlane.xlu0 %189
      %v191 = vmul.f32 %v181, 0.00390625
      %v192 = vmul.f32 %v184, 0.00390625
      %v193 = vmul.f32 %v187, 0.00390625
      %v194 = vmul.f32 %v190, 0.00390625
      %v195 = vld [vmem:[%s1] sm:$0xff]
      %v196 = vld [vmem:[%s1 + $0x8] sm:$0xff]
      %v197 = vld [vmem:[%s1 + $0x10] sm:$0xff]
      %v198 = vld [vmem:[%s1 + $0x18] sm:$0xff]
      %v203 = vlaneseq
      %v204 = vand.u32 %v203, 127
      %v205 = vlaneseq
      %v206 = vshrl.u32 %v205, 7
      %v207 = vsub.s32 %v204, %v206
      %v208 = vrot.slane %v191, %v207
      %v209 = vadd.s32 %v204, 4294967288
      %v210 = vlaneseq
      %v211 = vshrl.u32 %v210, 7
      %v212 = vsub.s32 %v209, %v211
      %v213 = vrot.slane %v192, %v212
      %vm214 = vcmask 130112
      %v215 = vsel %vm214, %v213, %v208
      %v216 = vadd.s32 %v204, 4294967280
      %v217 = vlaneseq
      %v218 = vshrl.u32 %v217, 7
      %v219 = vsub.s32 %v216, %v218
      %v220 = vrot.slane %v193, %v219
      %vm221 = vcmask 195712
      %v222 = vsel %vm221, %v220, %v215
      %v223 = vadd.s32 %v204, 4294967272
      %v224 = vlaneseq
      %v225 = vshrl.u32 %v224, 7
      %v226 = vsub.s32 %v223, %v225
      %v227 = vrot.slane %v194, %v226
      %vm228 = vcmask 261312
      %v229 = vsel %vm228, %v227, %v222
      %vm230 = vcmask 261120
      %v231 = vsel %vm230, %v229, 0
      %233 = vmatprep.subr.mxu0 0.0
      %234 = vmatpush1.msra.mxu0 %v195
      %235 = vmatprep.subr.mxu0 0.0
      %236 = vmatpush1.msra.mxu0 %v196
      %237 = vmatprep.subr.mxu0 0.0
      %238 = vmatpush1.msra.mxu0 %v197
      %239 = vmatprep.subr.mxu0 0.0
      %240 = vmatpush1.msra.mxu0 %v198
      %241 = vmatprep.subr.mxu0 0.0
      %242 = vmatpush1.msra.mxu0 0.0
      %243 = vmatprep.subr.mxu0 0.0
      %244 = vmatpush1.msra.mxu0 0.0
      %245 = vmatprep.subr.mxu0 0.0
      %246 = vmatpush1.msra.mxu0 0.0
      %247 = vmatprep.subr.mxu0 0.0
      %248 = vmatpush1.msra.mxu0 0.0
      %249 = vmatprep.subr.mxu0 0.0
      %250 = vmatpush1.msra.mxu0 0.0
      %251 = vmatprep.subr.mxu0 0.0
      %252 = vmatpush1.msra.mxu0 0.0
      %253 = vmatprep.subr.mxu0 0.0
      %254 = vmatpush1.msra.mxu0 0.0
      %255 = vmatprep.subr.mxu0 0.0
      %256 = vmatpush1.msra.mxu0 0.0
      %257 = vmatprep.subr.mxu0 0.0
      %258 = vmatpush1.msra.mxu0 0.0
      %259 = vmatprep.subr.mxu0 0.0
      %260 = vmatpush1.msra.mxu0 0.0
      %261 = vmatprep.subr.mxu0 0.0
      %262 = vmatpush1.msra.mxu0 0.0
      %263 = vmatprep.subr.mxu0 0.0
      %264 = vmatpush1.msra.mxu0 0.0
      %265 = vmatprep.subr.mxu0 0.0
      %266 = vmatpush1.msra.mxu0 0.0
      %267 = vmatprep.subr.mxu0 0.0
      %268 = vmatpush1.msra.mxu0 0.0
      %269 = vmatprep.subr.mxu0 0.0
      %270 = vmatpush1.msra.mxu0 0.0
      %271 = vmatprep.subr.mxu0 0.0
      %272 = vmatpush1.msra.mxu0 0.0
      %273 = vmatprep.subr.mxu0 0.0
      %274 = vmatpush1.msra.mxu0 0.0
      %275 = vmatprep.subr.mxu0 0.0
      %276 = vmatpush1.msra.mxu0 0.0
      %277 = vmatprep.subr.mxu0 0.0
      %278 = vmatpush1.msra.mxu0 0.0
      %279 = vmatprep.subr.mxu0 0.0
      %280 = vmatpush1.msra.mxu0 0.0
      %281 = vmatprep.subr.mxu0 0.0
      %282 = vmatpush1.msra.mxu0 0.0
      %283 = vmatprep.subr.mxu0 0.0
      %284 = vmatpush1.msra.mxu0 0.0
      %285 = vmatprep.subr.mxu0 0.0
      %286 = vmatpush1.msra.mxu0 0.0
      %287 = vmatprep.subr.mxu0 0.0
      %288 = vmatpush1.msra.mxu0 0.0
      %289 = vmatprep.subr.mxu0 0.0
      %290 = vmatpush1.msra.mxu0 0.0
      %291 = vmatprep.subr.mxu0 0.0
      %292 = vmatpush1.msra.mxu0 0.0
      %293 = vmatprep.subr.mxu0 0.0
      %294 = vmatpush1.msra.mxu0 0.0
      %295 = vmatprep.subr.mxu0 0.0
      %296 = vmatpush1.msra.mxu0 0.0
      %297 = vmatprep.mubr.f32.mxu0 0.0
      %298 = vmatmul.mubr.f32.gmra.mrb[0].mxu0 %v231
      %v299 = vpop.f32.mrb[0].mxu0
      %v300 = vadd.f32 0.0, %v299
      %v301 = vpop.f32.mrb[0].mxu0
      %302 = vdwg.mxu0
      %v303 = vmax.f32 %v300, 0.0
      %v304 = vld [vmem:[%s2] sm:$0x3]
      %vm305 = vcmask 15360
      %v307 = vsel %vm305, %v303, 0
      %vm309 = vcmask 1041408
      %v311 = vsel %vm309, %v304, 0
      %313 = vmatprep.subr.mxu0 0.0
      %314 = vmatpush1.msra.mxu0 %v311
      %315 = vmatprep.subr.mxu0 0.0
      %316 = vmatpush1.msra.mxu0 0.0
      %317 = vmatprep.subr.mxu0 0.0
      %318 = vmatpush1.msra.mxu0 0.0
      %319 = vmatprep.subr.mxu0 0.0
      %320 = vmatpush1.msra.mxu0 0.0
      %321 = vmatprep.subr.mxu0 0.0
      %322 = vmatpush1.msra.mxu0 0.0
      %323 = vmatprep.subr.mxu0 0.0
      %324 = vmatpush1.msra.mxu0 0.0
      %325 = vmatprep.subr.mxu0 0.0
      %326 = vmatpush1.msra.mxu0 0.0
      %327 = vmatprep.subr.mxu0 0.0
      %328 = vmatpush1.msra.mxu0 0.0
      %329 = vmatprep.subr.mxu0 0.0
      %330 = vmatpush1.msra.mxu0 0.0
      %331 = vmatprep.subr.mxu0 0.0
      %332 = vmatpush1.msra.mxu0 0.0
      %333 = vmatprep.subr.mxu0 0.0
      %334 = vmatpush1.msra.mxu0 0.0
      %335 = vmatprep.subr.mxu0 0.0
      %336 = vmatpush1.msra.mxu0 0.0
      %337 = vmatprep.subr.mxu0 0.0
      %338 = vmatpush1.msra.mxu0 0.0
      %339 = vmatprep.subr.mxu0 0.0
      %340 = vmatpush1.msra.mxu0 0.0
      %341 = vmatprep.subr.mxu0 0.0
      %342 = vmatpush1.msra.mxu0 0.0
      %343 = vmatprep.subr.mxu0 0.0
      %344 = vmatpush1.msra.mxu0 0.0
      %345 = vmatprep.subr.mxu0 0.0
      %346 = vmatpush1.msra.mxu0 0.0
      %347 = vmatprep.subr.mxu0 0.0
      %348 = vmatpush1.msra.mxu0 0.0
      %349 = vmatprep.subr.mxu0 0.0
      %350 = vmatpush1.msra.mxu0 0.0
      %351 = vmatprep.subr.mxu0 0.0
      %352 = vmatpush1.msra.mxu0 0.0
      %353 = vmatprep.subr.mxu0 0.0
      %354 = vmatpush1.msra.mxu0 0.0
      %355 = vmatprep.subr.mxu0 0.0
      %356 = vmatpush1.msra.mxu0 0.0
      %357 = vmatprep.subr.mxu0 0.0
      %358 = vmatpush1.msra.mxu0 0.0
      %359 = vmatprep.subr.mxu0 0.0
      %360 = vmatpush1.msra.mxu0 0.0
      %361 = vmatprep.subr.mxu0 0.0
      %362 = vmatpush1.msra.mxu0 0.0
      %363 = vmatprep.subr.mxu0 0.0
      %364 = vmatpush1.msra.mxu0 0.0
      %365 = vmatprep.subr.mxu0 0.0
      %366 = vmatpush1.msra.mxu0 0.0
      %367 = vmatprep.subr.mxu0 0.0
      %368 = vmatpush1.msra.mxu0 0.0
      %369 = vmatprep.subr.mxu0 0.0
      %370 = vmatpush1.msra.mxu0 0.0
      %371 = vmatprep.subr.mxu0 0.0
      %372 = vmatpush1.msra.mxu0 0.0
      %373 = vmatprep.subr.mxu0 0.0
      %374 = vmatpush1.msra.mxu0 0.0
      %375 = vmatprep.subr.mxu0 0.0
      %376 = vmatpush1.msra.mxu0 0.0
      %377 = vmatprep.mubr.f32.mxu0 0.0
      %378 = vmatmul.mubr.f32.gmra.mrb[0].mxu0 %v307
      %v379 = vpop.f32.mrb[0].mxu0
      %v380 = vadd.f32 0.0, %v379
      %v381 = vpop.f32.mrb[0].mxu0
      %382 = vdwg.mxu0
      %v383 = vxor.u32 %v380, 2147483648
      %v384 = vmul.f32 %v383, 1.442695
      %v385 = vpow.pop %v384
      %v386 = vadd.f32 %v385, 1.0
      %v387 = vrcp.pop %v386
      %v388 = vmul.f32 1.0, %v387
      %v389 = vlaneseq
      %v390 = vshrl.u32 %v389, 7
      %v391 = vsub.s32 0, %v390
      %v392 = vrot.slane %v388, %v391
      %394 = vbcast.lane.b32.xlu0 %v392, 256
      %v395 = vpop.permute.xlu0 %394
      %s397 = sor.u32 256, 8
      %398 = vbcast.lane.b32.xlu0 %v392, %s397
      %v399 = vpop.permute.xlu0 %398
      %s401 = sor.u32 256, 16
      %402 = vbcast.lane.b32.xlu0 %v392, %s401
      %v403 = vpop.permute.xlu0 %402
      %s405 = sor.u32 256, 24
      %406 = vbcast.lane.b32.xlu0 %v392, %s405
      %v407 = vpop.permute.xlu0 %406
      %v408 = vmul.f32 %v171, %v395
      %v409 = vmul.f32 %v172, %v395
      %v410 = vmul.f32 %v173, %v399
      %v411 = vmul.f32 %v174, %v399
      %v412 = vmul.f32 %v175, %v403
      %v413 = vmul.f32 %v176, %v403
      %v414 = vmul.f32 %v177, %v407
      %v415 = vmul.f32 %v178, %v407
      %416 = vst [vmem:[%s170] sm:$0xff] %v408
      %417 = vst [vmem:[%s170 + $0x8] sm:$0xff] %v409
      %418 = vst [vmem:[%s170 + $0x10] sm:$0xff] %v410
      %419 = vst [vmem:[%s170 + $0x18] sm:$0xff] %v411
      %420 = vst [vmem:[%s170 + $0x20] sm:$0xff] %v412
      %421 = vst [vmem:[%s170 + $0x28] sm:$0xff] %v413
      %422 = vst [vmem:[%s170 + $0x30] sm:$0xff] %v414
      %423 = vst [vmem:[%s170 + $0x38] sm:$0xff] %v415
      %p424 = scmp.lt.s32.totalorder %s14, 1
      %s425 = scalar_select %p424, %s14, 1
      %s426 = smul.addr %s425, 8
      %s427 = smul.addr %s426, 8
      %s428 = scalar_lea.vmem %s3, %s427
      // Predicated region
      $region33: #{_se_layer_impl.1} parent=31 // pred_check
        %p429 = pneg %p100
      $region34: #{_se_layer_impl.1} parent=31 // pred_check_branch
        %431 = sbr.rel (%p429) target = $region36
      $region35: #{_se_layer_impl.1} parent=31 // pred_region
        _
      $region36: #{_se_layer_impl.1} parent=31 // pred_fallthru
        _
    $region32: #{_se_layer_impl.1} parent=5 // pred_fallthru
      _
    %p432 = scmp.le.s32.totalorder 2, %s9
    // Predicated region
    $region37: #{_se_layer_impl.1} parent=5 // pred_check
      %p433 = pneg %p432
    $region38: #{_se_layer_impl.1} parent=5 // pred_check_branch
      %435 = sbr.rel (%p433) target = $region40
    $region39: #{_se_layer_impl.1} parent=5 // pred_region
      %s436 = ssub.s32 %s9, 2
      // Predicated region
      $region41: #{_se_layer_impl.1} parent=39 // pred_check
        %p437 = pneg %p106
      $region42: #{_se_layer_impl.1} parent=39 // pred_check_branch
        %439 = sbr.rel (%p437) target = $region44
      $region43: #{_se_layer_impl.1} parent=39 // pred_region
        %p440 = scmp.lt.s32.totalorder %s15, 1
        %s441 = scalar_select %p440, %s15, 1
        %s442 = smul.addr %s441, 8
        %s443 = smul.addr %s442, 8
        %s444 = scalar_lea.vmem %s3, %s443
      $region44: #{_se_layer_impl.1} parent=39 // pred_fallthru
        _
    $region40: #{_se_layer_impl.1} parent=5 // pred_fallthru
      _
  $region6: #{_se_layer_impl.1} parent=0 // loop_footer
    %s13 = sadd.s32 1, %s9
  $region7: #{_se_layer_impl.1} parent=0 // loop_footer_branch
    %8 = sbr.rel target = $region3
  $region8: #{_se_layer_impl.1} parent=0 // loop_exit
    _

</llo_original>
